<compile_context>
chip_gen: v7x
topology: tpu7x:2x2x1
jax: 0.10.0
libtpu: 0.0.40
codegen_flags: <defaults>
</compile_context>

<pallas_src>
import jax
import jax.numpy as jnp
from jax.experimental import pallas as pl
from jax.experimental.pallas import tpu as pltpu


def _round_up(n, m):
    return ((n + m - 1) // m) * m


def mlp_kernel(x_ref, w1_ref, b1_ref, w2_ref, b2_ref, o_ref):
    # x_ref : (4, TB)   batch on lanes
    # w1_ref: (16, 4)   PyTorch layout (out, in)
    # b1_ref: (16, 1)
    # w2_ref: (16, 1)   (PyTorch (1,16) transposed)
    # b2_ref: (1, 1)
    x = x_ref[...]
    w1 = w1_ref[...]
    # Layer 1: h = W1 @ x via 4 VPU broadcast FMAs (K=4, no MXU).
    h = w1[:, 0:1] * x[0:1, :]
    h = h + w1[:, 1:2] * x[1:2, :]
    h = h + w1[:, 2:3] * x[2:3, :]
    h = h + w1[:, 3:4] * x[3:4, :]
    h = h + b1_ref[...]
    h = jnp.maximum(h, 0.0)                      # ReLU on VPU
    # Layer 2: 16 -> 1 as elementwise scale + sublane (XLU) reduce.
    y = jnp.sum(h * w2_ref[...], axis=0, keepdims=True) + b2_ref[...]
    o_ref[...] = y.astype(o_ref.dtype)           # lane-dense (1, TB) store


def mymodel_forward(x, w1, b1, w2, b2, tile_b=512):
    """x: (B, 4) row-major like PyTorch.  Weights in PyTorch layout:
       w1: (16, 4), b1: (16,), w2: (1, 16), b2: (1,).  Returns (B, 1)."""
    B = x.shape[0]
    dt = x.dtype

    # Batch tile: multiple of 128, capped so tiny inputs use a single step.
    tb = min(tile_b, _round_up(max(B, 1), 128))
    Bp = _round_up(B, tb)

    # Lane-major layout: batch on lanes; pad batch up to the tile boundary.
    # TODO(synk): for very large B, fold this transpose/pad into the producer.
    x_t = jnp.zeros((4, Bp), dt).at[:, :B].set(x.T)
    w1c = w1.astype(dt)                            # (16, 4)
    b1c = b1.reshape(16, 1).astype(dt)             # (16, 1)
    w2c = w2.reshape(1, 16).T.astype(dt)           # (16, 1)
    b2c = b2.reshape(1, 1).astype(dt)              # (1, 1)

    grid = (Bp // tb,)
    y_t = pl.pallas_call(
        mlp_kernel,
        out_shape=jax.ShapeDtypeStruct((1, Bp), dt),
        grid_spec=pltpu.PrefetchScalarGridSpec(
            num_scalar_prefetch=0,
            grid=grid,
            in_specs=[
                pl.BlockSpec((4, tb), lambda i: (0, i)),    # x tile (batch on lanes)
                pl.BlockSpec((16, 4), lambda i: (0, 0)),    # weights: constant
                pl.BlockSpec((16, 1), lambda i: (0, 0)),    # index_map -> stay
                pl.BlockSpec((16, 1), lambda i: (0, 0)),    # resident in VMEM
                pl.BlockSpec((1, 1), lambda i: (0, 0)),
            ],
            out_specs=pl.BlockSpec((1, tb), lambda i: (0, i)),
        ),
        compiler_params=pltpu.CompilerParams(
            dimension_semantics=("parallel",),   # shard batch grid across TCs (v7x)
        ),
    )(x_t, w1c, b1c, w2c, b2c)

    return y_t[0, :B].reshape(B, 1)


def init_params(key):
    # PyTorch Linear default init (uniform +/- 1/sqrt(fan_in)), PyTorch layout.
    k1, k2, k3, k4 = jax.random.split(key, 4)
    lim1 = 1.0 / jnp.sqrt(4.0)
    lim2 = 1.0 / jnp.sqrt(16.0)
    w1 = jax.random.uniform(k1, (16, 4), jnp.float32, -lim1, lim1)   # (out, in)
    b1 = jax.random.uniform(k2, (16,), jnp.float32, -lim1, lim1)
    w2 = jax.random.uniform(k3, (1, 16), jnp.float32, -lim2, lim2)
    b2 = jax.random.uniform(k4, (1,), jnp.float32, -lim2, lim2)
    return w1, b1, w2, b2


if __name__ == "__main__":
    key = jax.random.PRNGKey(0)
    kx, kp = jax.random.split(key)
    B = 8
    x = jax.random.normal(kx, (B, 4), jnp.float32)
    w1, b1, w2, b2 = init_params(kp)

    out = mymodel_forward(x, w1, b1, w2, b2)
    out = jax.block_until_ready(out)

    # Reference check in plain JAX (PyTorch semantics: y = ReLU(xW1^T+b1)W2^T+b2).
    ref = jnp.maximum(x @ w1.T + b1, 0.0) @ w2.T + b2
    assert out.shape == (B, 1)
    assert jnp.allclose(out, ref, atol=1e-5, rtol=1e-5)

    print("KERNEL_OK")
</pallas_src>

<mosaic_0001>
module attributes {stable_mosaic.version = 11 : i64} {
  func.func @mlp_kernel(%arg0: i32, %arg1: memref<4x128xf32, #tpu.memory_space<vmem>>, %arg2: memref<16x4xf32, #tpu.memory_space<vmem>>, %arg3: memref<16x1xf32, #tpu.memory_space<vmem>>, %arg4: memref<16x1xf32, #tpu.memory_space<vmem>>, %arg5: memref<1x1xf32, #tpu.memory_space<vmem>>, %arg6: memref<1x128xf32, #tpu.memory_space<vmem>>) attributes {dimension_semantics = [#tpu.dimension_semantics<parallel>], iteration_bounds = array<i64: 1>, scalar_prefetch = 0 : i64, scratch_operands = 0 : i64, tpu.core_type = #tpu.core_type<tc>, window_params = [{transform_indices = @transform_0, window_bounds = array<i64: 4, 128>}, {pipeline_mode = #tpu.pipeline_mode<synchronous>, transform_indices = @transform_1, window_bounds = array<i64: 16, 4>}, {pipeline_mode = #tpu.pipeline_mode<synchronous>, transform_indices = @transform_2, window_bounds = array<i64: 16, 1>}, {pipeline_mode = #tpu.pipeline_mode<synchronous>, transform_indices = @transform_3, window_bounds = array<i64: 16, 1>}, {pipeline_mode = #tpu.pipeline_mode<synchronous>, transform_indices = @transform_4, window_bounds = array<i64: 1, 1>}, {transform_indices = @transform_5, window_bounds = array<i64: 1, 128>}]} {
    %c0 = arith.constant 0 : index
    %c0_0 = arith.constant 0 : index
    %0 = vector.load %arg1[%c0, %c0_0] : memref<4x128xf32, #tpu.memory_space<vmem>>, vector<4x128xf32>
    %c0_1 = arith.constant 0 : index
    %c0_2 = arith.constant 0 : index
    %1 = vector.load %arg2[%c0_1, %c0_2] : memref<16x4xf32, #tpu.memory_space<vmem>>, vector<16x4xf32>
    %2 = vector.extract_strided_slice %1 {offsets = [0, 0], sizes = [16, 1], strides = [1, 1]} : vector<16x4xf32> to vector<16x1xf32>
    %3 = vector.extract_strided_slice %0 {offsets = [0, 0], sizes = [1, 128], strides = [1, 1]} : vector<4x128xf32> to vector<1x128xf32>
    %4 = vector.broadcast %2 : vector<16x1xf32> to vector<16x128xf32>
    %5 = vector.broadcast %3 : vector<1x128xf32> to vector<16x128xf32>
    %6 = arith.mulf %4, %5 : vector<16x128xf32>
    %7 = vector.extract_strided_slice %1 {offsets = [0, 1], sizes = [16, 1], strides = [1, 1]} : vector<16x4xf32> to vector<16x1xf32>
    %8 = vector.extract_strided_slice %0 {offsets = [1, 0], sizes = [1, 128], strides = [1, 1]} : vector<4x128xf32> to vector<1x128xf32>
    %9 = vector.broadcast %7 : vector<16x1xf32> to vector<16x128xf32>
    %10 = vector.broadcast %8 : vector<1x128xf32> to vector<16x128xf32>
    %11 = arith.mulf %9, %10 : vector<16x128xf32>
    %12 = arith.addf %6, %11 : vector<16x128xf32>
    %13 = vector.extract_strided_slice %1 {offsets = [0, 2], sizes = [16, 1], strides = [1, 1]} : vector<16x4xf32> to vector<16x1xf32>
    %14 = vector.extract_strided_slice %0 {offsets = [2, 0], sizes = [1, 128], strides = [1, 1]} : vector<4x128xf32> to vector<1x128xf32>
    %15 = vector.broadcast %13 : vector<16x1xf32> to vector<16x128xf32>
    %16 = vector.broadcast %14 : vector<1x128xf32> to vector<16x128xf32>
    %17 = arith.mulf %15, %16 : vector<16x128xf32>
    %18 = arith.addf %12, %17 : vector<16x128xf32>
    %19 = vector.extract_strided_slice %1 {offsets = [0, 3], sizes = [16, 1], strides = [1, 1]} : vector<16x4xf32> to vector<16x1xf32>
    %20 = vector.extract_strided_slice %0 {offsets = [3, 0], sizes = [1, 128], strides = [1, 1]} : vector<4x128xf32> to vector<1x128xf32>
    %21 = vector.broadcast %19 : vector<16x1xf32> to vector<16x128xf32>
    %22 = vector.broadcast %20 : vector<1x128xf32> to vector<16x128xf32>
    %23 = arith.mulf %21, %22 : vector<16x128xf32>
    %24 = arith.addf %18, %23 : vector<16x128xf32>
    %c0_3 = arith.constant 0 : index
    %c0_4 = arith.constant 0 : index
    %25 = vector.load %arg3[%c0_3, %c0_4] : memref<16x1xf32, #tpu.memory_space<vmem>>, vector<16x1xf32>
    %26 = vector.broadcast %25 : vector<16x1xf32> to vector<16x128xf32>
    %27 = arith.addf %24, %26 : vector<16x128xf32>
    %cst = arith.constant 0.000000e+00 : f32
    %28 = vector.broadcast %cst : f32 to vector<16x128xf32>
    %29 = arith.maximumf %27, %28 : vector<16x128xf32>
    %c0_5 = arith.constant 0 : index
    %c0_6 = arith.constant 0 : index
    %30 = vector.load %arg4[%c0_5, %c0_6] : memref<16x1xf32, #tpu.memory_space<vmem>>, vector<16x1xf32>
    %31 = vector.broadcast %30 : vector<16x1xf32> to vector<16x128xf32>
    %32 = arith.mulf %29, %31 : vector<16x128xf32>
    %cst_7 = arith.constant dense<0.000000e+00> : vector<128xf32>
    %33 = vector.multi_reduction <add>, %32, %cst_7 [0] : vector<16x128xf32> to vector<128xf32>
    %34 = vector.shape_cast %33 : vector<128xf32> to vector<1x128xf32>
    %c0_8 = arith.constant 0 : index
    %c0_9 = arith.constant 0 : index
    %35 = vector.load %arg5[%c0_8, %c0_9] : memref<1x1xf32, #tpu.memory_space<vmem>>, vector<1x1xf32>
    %36 = vector.broadcast %35 : vector<1x1xf32> to vector<1x128xf32>
    %37 = arith.addf %34, %36 : vector<1x128xf32>
    %c0_10 = arith.constant 0 : index
    %c0_11 = arith.constant 0 : index
    %38 = vector.load %arg6[%c0_10, %c0_11] : memref<1x128xf32, #tpu.memory_space<vmem>>, vector<1x128xf32>
    tpu.vector_store %arg6[%c0_10, %c0_11], %37 {strides = array<i32>} : memref<1x128xf32, #tpu.memory_space<vmem>>, vector<1x128xf32>,
    return
  }
  func.func @transform_0(%arg0: i32) -> (i32, i32) {
    %c0_i32 = arith.constant 0 : i32
    %c0_i32_0 = arith.constant 0 : i32
    return %c0_i32, %arg0 : i32, i32
  }
  func.func @transform_1(%arg0: i32) -> (i32, i32) {
    %c0_i32 = arith.constant 0 : i32
    %c0_i32_0 = arith.constant 0 : i32
    %c0_i32_1 = arith.constant 0 : i32
    return %c0_i32, %c0_i32_0 : i32, i32
  }
  func.func @transform_2(%arg0: i32) -> (i32, i32) {
    %c0_i32 = arith.constant 0 : i32
    %c0_i32_0 = arith.constant 0 : i32
    %c0_i32_1 = arith.constant 0 : i32
    return %c0_i32, %c0_i32_0 : i32, i32
  }
  func.func @transform_3(%arg0: i32) -> (i32, i32) {
    %c0_i32 = arith.constant 0 : i32
    %c0_i32_0 = arith.constant 0 : i32
    %c0_i32_1 = arith.constant 0 : i32
    return %c0_i32, %c0_i32_0 : i32, i32
  }
  func.func @transform_4(%arg0: i32) -> (i32, i32) {
    %c0_i32 = arith.constant 0 : i32
    %c0_i32_0 = arith.constant 0 : i32
    %c0_i32_1 = arith.constant 0 : i32
    return %c0_i32, %c0_i32_0 : i32, i32
  }
  func.func @transform_5(%arg0: i32) -> (i32, i32) {
    %c0_i32 = arith.constant 0 : i32
    %c0_i32_0 = arith.constant 0 : i32
    return %c0_i32, %arg0 : i32, i32
  }
}

</mosaic_0001>

<llo_original>
// kernel: tpu_custom_call.1
$region0: #{tpu_custom_call.1}
  #allocation0 [shape = 'u32[]', space=smem, size = 0x4, offset = 0x4, fixed_abs, tag = 'smem constant byte address 0x4 - core index']
  #allocation1 [shape = 'u32[144,128]{1,0:T(1,128)}', space=vmem, size = 0x12000, scoped, tag = 'internal scratch']
  #allocation2 [shape = 'f32[1,1]{1,0:T(1,128)S(1)}', space=vmem, size = 0x200, scoped, tag = 'scoped memory for tpu_custom_call.1']
  %s0 = inlined_call_operand.vmem [shape: f32[4,128], index: 0, kind: input, shape index: {}]
  %s1 = inlined_call_operand.vmem [shape: f32[16,4], index: 1, kind: input, shape index: {}]
  %s2 = inlined_call_operand.vmem [shape: f32[16,1], index: 2, kind: input, shape index: {}]
  %s3 = inlined_call_operand.vmem [shape: f32[16,1], index: 3, kind: input, shape index: {}]
  %s4 = inlined_call_operand.<no memory space> [shape: f32[1,1], index: 4, kind: input, shape index: {}]
  %s5 = inlined_call_operand.hbm [shape: f32[1,128], index: 5, kind: output, shape index: {}]
  %s6 = sld [smem:[#allocation0]]
  $region30: #{tpu_custom_call.1} parent=0
    _
  %s8 = ssub.s32 1, %s6
  %s9 = scalar_select 0, %s8, %s6
  %v10 = vstv %s4
  %11 = vst [vmem:[#allocation2] sm:$0x1] %v10
  $region1: #{tpu_custom_call.1} parent=0
    #allocation3 [shape = 'u8[512]{0}', space=vmem, size = 0x400, scoped, tag = 'output window, operand 0, single buffered']
    #allocation4 [shape = 's32[1]{0}', space=sflag, size = 0x4, scoped, tag = 'scoped memory for tpu_custom_call.1']
    %12 = vsyncpa [#allocation4], 0
    // Predicated region
    $region2: #{tpu_custom_call.1} parent=1 // pred_check
      _
    $region3: #{tpu_custom_call.1} parent=1 // pred_check_branch
      %14 = sbr.rel (0) target = $region5
    $region4: #{tpu_custom_call.1} parent=1 // pred_region
      _
    $region5: #{tpu_custom_call.1} parent=1 // pred_fallthru
      _
    // Predicated region
    $region6: #{tpu_custom_call.1} parent=1 // pred_check
      _
    $region7: #{tpu_custom_call.1} parent=1 // pred_check_branch
      %16 = sbr.rel (0) target = $region9
    $region8: #{tpu_custom_call.1} parent=1 // pred_region
      _
    $region9: #{tpu_custom_call.1} parent=1 // pred_fallthru
      _
    // Predicated region
    $region10: #{tpu_custom_call.1} parent=1 // pred_check
      _
    $region11: #{tpu_custom_call.1} parent=1 // pred_check_branch
      %18 = sbr.rel (0) target = $region13
    $region12: #{tpu_custom_call.1} parent=1 // pred_region
      _
    $region13: #{tpu_custom_call.1} parent=1 // pred_fallthru
      _
    // Predicated region
    $region14: #{tpu_custom_call.1} parent=1 // pred_check
      _
    $region15: #{tpu_custom_call.1} parent=1 // pred_check_branch
      %20 = sbr.rel (0) target = $region17
    $region16: #{tpu_custom_call.1} parent=1 // pred_region
      _
    $region17: #{tpu_custom_call.1} parent=1 // pred_fallthru
      _
    // Predicated region
    $region18: #{tpu_custom_call.1} parent=1 // pred_check
      _
    $region19: #{tpu_custom_call.1} parent=1 // pred_check_branch
      %22 = sbr.rel (0) target = $region21
    $region20: #{tpu_custom_call.1} parent=1 // pred_region
      _
    $region21: #{tpu_custom_call.1} parent=1 // pred_fallthru
      _
    %v23 = vld [vmem:[%s0] sm:$0xf]
    %v24 = vld [vmem:[%s1] sm:$0xff]
    %v25 = vld [vmem:[%s1 + $0x8] sm:$0xff]
    %27 = vset.pattern.permute.xlu0 0
    %28 = vperm.xlu0 %27, %v24
    %v29 = vpop.permute.xlu0 %28
    %32 = vset.pattern.permute.xlu0 0
    %33 = vperm.xlu0 %32, %v25
    %v34 = vpop.permute.xlu0 %33
    %v36 = vlaneseq
    %v37 = vshrl.u32 %v36, 7
    %v38 = vsub.s32 0, %v37
    %v39 = vrot.slane %v23, %v38
    %v40 = vmul.f32 %v29, %v39
    %v41 = vmul.f32 %v34, %v39
    %42 = vset.pattern.permute.xlu0 1
    %43 = vperm.xlu0 %42, %v24
    %v44 = vpop.permute.xlu0 %43
    %46 = vset.pattern.permute.xlu0 1
    %47 = vperm.xlu0 %46, %v25
    %v48 = vpop.permute.xlu0 %47
    %v50 = vlaneseq
    %v51 = vshrl.u32 %v50, 7
    %v52 = vsub.s32 1, %v51
    %v53 = vrot.slane %v23, %v52
    %v54 = vmul.f32 %v44, %v53
    %v55 = vmul.f32 %v48, %v53
    %v56 = vadd.f32 %v40, %v54
    %v57 = vadd.f32 %v41, %v55
    %58 = vset.pattern.permute.xlu0 2
    %59 = vperm.xlu0 %58, %v24
    %v60 = vpop.permute.xlu0 %59
    %62 = vset.pattern.permute.xlu0 2
    %63 = vperm.xlu0 %62, %v25
    %v64 = vpop.permute.xlu0 %63
    %v66 = vlaneseq
    %v67 = vshrl.u32 %v66, 7
    %v68 = vsub.s32 2, %v67
    %v69 = vrot.slane %v23, %v68
    %v70 = vmul.f32 %v60, %v69
    %v71 = vmul.f32 %v64, %v69
    %v72 = vadd.f32 %v56, %v70
    %v73 = vadd.f32 %v57, %v71
    %74 = vset.pattern.permute.xlu0 3
    %75 = vperm.xlu0 %74, %v24
    %v76 = vpop.permute.xlu0 %75
    %78 = vset.pattern.permute.xlu0 3
    %79 = vperm.xlu0 %78, %v25
    %v80 = vpop.permute.xlu0 %79
    %v82 = vlaneseq
    %v83 = vshrl.u32 %v82, 7
    %v84 = vsub.s32 3, %v83
    %v85 = vrot.slane %v23, %v84
    %v86 = vmul.f32 %v76, %v85
    %v87 = vmul.f32 %v80, %v85
    %v88 = vadd.f32 %v72, %v86
    %v89 = vadd.f32 %v73, %v87
    %v90 = vld [vmem:[%s2] sm:$0xff]
    %v91 = vld [vmem:[%s2 + $0x8] sm:$0xff]
    %93 = vset.pattern.permute.xlu0 0
    %94 = vperm.xlu0 %93, %v90
    %v95 = vpop.permute.xlu0 %94
    %98 = vset.pattern.permute.xlu0 0
    %99 = vperm.xlu0 %98, %v91
    %v100 = vpop.permute.xlu0 %99
    %v102 = vadd.f32 %v88, %v95
    %v103 = vadd.f32 %v89, %v100
    %v104 = vmax.f32 %v102, 0.0
    %v105 = vmax.f32 %v103, 0.0
    %v106 = vld [vmem:[%s3] sm:$0xff]
    %v107 = vld [vmem:[%s3 + $0x8] sm:$0xff]
    %109 = vset.pattern.permute.xlu0 0
    %110 = vperm.xlu0 %109, %v106
    %v111 = vpop.permute.xlu0 %110
    %114 = vset.pattern.permute.xlu0 0
    %115 = vperm.xlu0 %114, %v107
    %v116 = vpop.permute.xlu0 %115
    %v118 = vmul.f32 %v104, %v111
    %v119 = vmul.f32 %v105, %v116
    %v120 = vadd.f32 %v118, %v119
    %v121 = vrot.slane %v120, 4
    %v122 = vadd.f32 %v120, %v121
    %v123 = vrot.slane %v122, 2
    %v124 = vadd.f32 %v122, %v123
    %v125 = vrot.slane %v124, 1
    %v126 = vadd.f32 %v124, %v125
    %v127 = vld [vmem:[#allocation2] sm:$0x1]
    %129 = vset.pattern.permute.xlu0 0
    %130 = vperm.xlu0 %129, %v127
    %v131 = vpop.permute.xlu0 %130
    %v133 = vlaneseq
    %v134 = vshrl.u32 %v133, 7
    %v135 = vsub.s32 0, %v134
    %v136 = vrot.slane %v131, %v135
    %v137 = vadd.f32 %v126, %v136
    %138 = vst [vmem:[#allocation3] sm:$0x1] %v137
    // Predicated region
    $region22: #{tpu_custom_call.1} parent=1 // pred_check
      _
    $region23: #{tpu_custom_call.1} parent=1 // pred_check_branch
      %140 = sbr.rel (0) target = $region25
    $region24: #{tpu_custom_call.1} parent=1 // pred_region
      %s142 = ssub.s32 16, 16
      %143 = vsyncadd [#allocation4], %s142
      %s145 = sshll.u32 [#allocation3], 4
      %s146 = int_to_ptr.vmem [resolvable:$true] %s145
      %148 = dma.vmem_to_hbm [thread:$0]  %s146, 16, %s5, [#allocation4]
    $region25: #{tpu_custom_call.1} parent=1 // pred_fallthru
      _
    // Predicated region
    $region26: #{tpu_custom_call.1} parent=1 // pred_check
      _
    $region27: #{tpu_custom_call.1} parent=1 // pred_check_branch
      %150 = sbr.rel (0) target = $region29
    $region28: #{tpu_custom_call.1} parent=1 // pred_region
      %151 = dma.done [#allocation4], 16
    $region29: #{tpu_custom_call.1} parent=1 // pred_fallthru
      _
    %152 = vsyncpa [#allocation4], 1

</llo_original>
